<compile_context>
chip_gen: v5e
topology: v5e:2x2
jax: 0.10.0
libtpu: 0.0.40
codegen_flags: <defaults>
</compile_context>

<pallas_src>
import jax
import jax.numpy as jnp
from jax.experimental import pallas as pl
from jax.experimental.pallas import tpu as pltpu

_ITEMSIZE = 4  # f32 bytes

try:  # VMEM capacity differs across chips (64 MiB on v7x, 128 MiB v5e/v6e).
    _VMEM_CAP = int(pltpu.get_tpu_info().vmem_capacity_bytes)
except Exception:  # conservative fallback
    _VMEM_CAP = 64 * 1024 * 1024


def _convT_kernel(x_ref, w_ref, b_ref, o_ref):
    # x_ref: (Cin, TR*W)   w_ref: (4*Cout, Cin)   b_ref: (4*Cout, 1)
    # o_ref: (4*Cout, TR*W)
    z = jnp.dot(w_ref[...], x_ref[...], preferred_element_type=jnp.float32)
    o_ref[...] = (z + b_ref[...]).astype(o_ref.dtype)


def _pick_row_tile(B, H, W, Cin, n_rows_out, vmem_cap):
    """Pick TR = input image rows per grid step.

    TR must divide H and the streamed lane dim TR*W must be a multiple of 128
    (or the full H*W, which is always legal) per the (8,128) block rule.
    Among valid TRs pick the largest whose double-buffered tiles fit the
    per-chip budget, then back off (still fitting) if that leaves fewer than
    4 grid steps, so v7x's two TensorCores both get pipelined work.
    """
    budget = min(vmem_cap // 3, 40 * 1024 * 1024)   # ~21 MiB on v7x, 40 MiB else

    def aligned(tr):
        return (tr * W) % 128 == 0 or tr == H

    def need(tr):
        x_t = Cin * tr * W * _ITEMSIZE
        o_t = n_rows_out * tr * W * _ITEMSIZE
        resident = 2 * n_rows_out * (Cin + 1) * _ITEMSIZE   # weight+bias, x2 bufs
        return 2 * (x_t + o_t) + resident

    divisors = [d for d in range(1, H + 1) if H % d == 0 and aligned(d)]
    fitting = [d for d in divisors if need(d) <= budget]
    if fitting:
        tr = max(fitting)
        if B * (H // tr) < 4:                         # prefer >=4 grid steps
            better = [d for d in fitting if B * (H // d) >= 4]
            if better:
                tr = max(better)
    else:                                             # huge image: smallest legal tile
        tr = min(divisors)
    return tr, need(tr)


def upsample_convT2x2(x_nchw, weight, bias):
    """ConvTranspose2d(kernel_size=2, stride=2) forward (PyTorch semantics).

    x_nchw : (B, Cin, H, W)  float32
    weight : (Cin, Cout, 2, 2)  (PyTorch ConvTranspose2d weight layout)
    bias   : (Cout,)
    returns: (B, Cout, 2H, 2W)
    """
    B, Cin, H, W = x_nchw.shape
    Cin_w, Cout, kH, kW = weight.shape
    assert Cin_w == Cin and (kH, kW) == (2, 2)

    n_rows_out = kH * kW * Cout                                   # 4*Cout

    # ---- host-side prep (tiny weight shuffle + free reshapes) ----
    xr = x_nchw.reshape(B, Cin, H * W)                            # free (bitcast)
    # wq[(di,dj,o), c] = weight[c, o, di, dj]
    wq = jnp.transpose(weight, (2, 3, 1, 0)).reshape(n_rows_out, Cin)
    bq = jnp.tile(bias, kH * kW).reshape(n_rows_out, 1)

    # ---- tiling ----
    TR, need = _pick_row_tile(B, H, W, Cin, n_rows_out, _VMEM_CAP)
    grid = (B, H // TR)
    vmem_limit = int(min(max(2 * need, 32 * 1024 * 1024), _VMEM_CAP * 3 // 4))

    flops = 2 * B * H * W * Cin * n_rows_out
    bytes_accessed = (xr.size + B * n_rows_out * H * W + wq.size + bq.size) * _ITEMSIZE

    ym = pl.pallas_call(
        _convT_kernel,
        out_shape=jax.ShapeDtypeStruct((B, n_rows_out, H * W), x_nchw.dtype),
        grid=grid,
        in_specs=[
            pl.BlockSpec((None, Cin, TR * W), lambda n, r: (n, 0, r)),   # streamed x
            pl.BlockSpec((n_rows_out, Cin), lambda n, r: (0, 0)),        # resident W
            pl.BlockSpec((n_rows_out, 1), lambda n, r: (0, 0)),          # resident b
        ],
        out_specs=pl.BlockSpec((None, n_rows_out, TR * W), lambda n, r: (n, 0, r)),
        compiler_params=pltpu.CompilerParams(
            dimension_semantics=("parallel", "parallel"),
            vmem_limit_bytes=vmem_limit,
        ),
        cost_estimate=pl.CostEstimate(
            flops=flops, transcendentals=0, bytes_accessed=bytes_accessed),
    )(xr, wq, bq)

    # ym[n, (di,dj,o), i*W+j] -> out[n, o, 2i+di, 2j+dj]  (single fused XLA pass
    # over the unpadded output; the reshapes are metadata-only).
    y6 = ym.reshape(B, kH, kW, Cout, H, W)
    out = jnp.transpose(y6, (0, 3, 4, 1, 5, 2)).reshape(B, Cout, kH * H, kW * W)
    return out


def _reference(x_nchw, weight, bias):
    # Pure-JAX reference: explicit scatter of the 2x2 patches.
    B, Cin, H, W = x_nchw.shape
    Cout = weight.shape[1]
    r = jnp.einsum("nchw,coij->nohiwj", x_nchw, weight)
    r = r.reshape(B, Cout, 2 * H, 2 * W)
    return r + bias[None, :, None, None]


if __name__ == "__main__":
    key = jax.random.PRNGKey(0)
    k_x, k_w, k_b = jax.random.split(key, 3)

    B, Cin, Cout, H, W = 2, 4, 4, 16, 16
    x = jax.random.normal(k_x, (B, Cin, H, W), dtype=jnp.float32)
    # ConvTranspose2d weight shape: (in_channels, out_channels, kH, kW)
    weight = jax.random.normal(k_w, (Cin, Cout, 2, 2), dtype=jnp.float32) * 0.1
    bias = jax.random.normal(k_b, (Cout,), dtype=jnp.float32) * 0.1

    out = jax.jit(upsample_convT2x2)(x, weight, bias)
    out = jax.block_until_ready(out)

    ref = _reference(x, weight, bias)
    assert out.shape == (B, Cout, 2 * H, 2 * W), out.shape
    assert jnp.allclose(out, ref, atol=1e-5, rtol=1e-5), "mismatch vs reference"

    print("KERNEL_OK")
</pallas_src>

<mosaic_0001>
module attributes {stable_mosaic.version = 11 : i64} {
  func.func @_convT_kernel(%arg0: i32, %arg1: i32, %arg2: memref<1x4x128xf32, #tpu.memory_space<vmem>>, %arg3: memref<16x4xf32, #tpu.memory_space<vmem>>, %arg4: memref<16x1xf32, #tpu.memory_space<vmem>>, %arg5: memref<1x16x128xf32, #tpu.memory_space<vmem>>) attributes {dimension_semantics = [#tpu.dimension_semantics<parallel>, #tpu.dimension_semantics<parallel>], iteration_bounds = array<i64: 2, 2>, scalar_prefetch = 0 : i64, scratch_operands = 0 : i64, tpu.core_type = #tpu.core_type<tc>, window_params = [{transform_indices = @transform_0, window_bounds = array<i64: 1, 4, 128>}, {pipeline_mode = #tpu.pipeline_mode<synchronous>, transform_indices = @transform_1, window_bounds = array<i64: 16, 4>}, {pipeline_mode = #tpu.pipeline_mode<synchronous>, transform_indices = @transform_2, window_bounds = array<i64: 16, 1>}, {transform_indices = @transform_3, window_bounds = array<i64: 1, 16, 128>}]} {
    %c0 = arith.constant 0 : index
    %c0_0 = arith.constant 0 : index
    %0 = vector.load %arg3[%c0, %c0_0] : memref<16x4xf32, #tpu.memory_space<vmem>>, vector<16x4xf32>
    %c0_1 = arith.constant 0 : index
    %c0_2 = arith.constant 0 : index
    %c0_3 = arith.constant 0 : index
    %1 = vector.load %arg2[%c0_1, %c0_2, %c0_3] : memref<1x4x128xf32, #tpu.memory_space<vmem>>, vector<1x4x128xf32>
    %2 = vector.shape_cast %1 : vector<1x4x128xf32> to vector<4x128xf32>
    %cst = arith.constant dense<0.000000e+00> : vector<16x128xf32>
    %3 = tpu.matmul %0, %2, %cst {dimension_numbers = #tpu.dot_dimension_numbers<[1], [0], [0], [1], [0, 0, 1, 1], [], []>} : vector<16x4xf32>, vector<4x128xf32>, vector<16x128xf32> -> vector<16x128xf32>
    %c0_4 = arith.constant 0 : index
    %c0_5 = arith.constant 0 : index
    %4 = vector.load %arg4[%c0_4, %c0_5] : memref<16x1xf32, #tpu.memory_space<vmem>>, vector<16x1xf32>
    %5 = vector.broadcast %4 : vector<16x1xf32> to vector<16x128xf32>
    %6 = arith.addf %3, %5 : vector<16x128xf32>
    %c0_6 = arith.constant 0 : index
    %c0_7 = arith.constant 0 : index
    %c0_8 = arith.constant 0 : index
    %7 = vector.load %arg5[%c0_6, %c0_7, %c0_8] : memref<1x16x128xf32, #tpu.memory_space<vmem>>, vector<1x16x128xf32>
    %8 = vector.shape_cast %7 : vector<1x16x128xf32> to vector<16x128xf32>
    %9 = vector.shape_cast %6 : vector<16x128xf32> to vector<1x16x128xf32>
    tpu.vector_store %arg5[%c0_6, %c0_7, %c0_8], %9 {strides = array<i32>} : memref<1x16x128xf32, #tpu.memory_space<vmem>>, vector<1x16x128xf32>,
    return
  }
  func.func @transform_0(%arg0: i32, %arg1: i32) -> (i32, i32, i32) {
    %c0_i32 = arith.constant 0 : i32
    %c0_i32_0 = arith.constant 0 : i32
    return %arg0, %c0_i32, %arg1 : i32, i32, i32
  }
  func.func @transform_1(%arg0: i32, %arg1: i32) -> (i32, i32) {
    %c0_i32 = arith.constant 0 : i32
    %c0_i32_0 = arith.constant 0 : i32
    %c0_i32_1 = arith.constant 0 : i32
    return %c0_i32, %c0_i32_0 : i32, i32
  }
  func.func @transform_2(%arg0: i32, %arg1: i32) -> (i32, i32) {
    %c0_i32 = arith.constant 0 : i32
    %c0_i32_0 = arith.constant 0 : i32
    %c0_i32_1 = arith.constant 0 : i32
    return %c0_i32, %c0_i32_0 : i32, i32
  }
  func.func @transform_3(%arg0: i32, %arg1: i32) -> (i32, i32, i32) {
    %c0_i32 = arith.constant 0 : i32
    %c0_i32_0 = arith.constant 0 : i32
    return %arg0, %c0_i32, %arg1 : i32, i32, i32
  }
}

</mosaic_0001>

<llo_original>
// kernel: tile.0
$region0: #{tile.0}
  %s0 = inlined_call_operand.vmem [shape: f32[4,4], index: 0, kind: input, shape index: {}]
  %s1 = inlined_call_operand.vmem [shape: f32[16,1], index: 1, kind: output, shape index: {}]
  $region1: #{tile.0} parent=0
    #allocation0 [shape = 'u8[4096]{0}', space=vmem, size = 0x1000, scoped, tag = 'scoped mem for input reshape']
    %s3 = ssub.s32 16, 1
    %v4 = vld [vmem:[%s0] sm:%s3]
    %5 = vst [vmem:[#allocation0] sm:%s3] %v4
    %v6 = vld [vmem:[#allocation0] sm:$0xf]
    %vm7 = vcmask 7168
    %8 = vst.msk [vmem:[%s1] ss:$4 sm:$0xf] %vm7, %v6
    %v9 = vld [vmem:[#allocation0] sm:$0xf]
    %10 = vrot.lane.b32.xlu0 %v9, 127
    %v11 = vpop.permute.xlu0 %10
    %vm12 = vcmask 7168
    %s13 = scalar_lea.vmem %s1, 1
    %14 = vst.msk [vmem:[%s13] ss:$4 sm:$0xf] %vm12, %v11
    %v15 = vld [vmem:[#allocation0] sm:$0xf]
    %16 = vrot.lane.b32.xlu0 %v15, 126
    %v17 = vpop.permute.xlu0 %16
    %vm18 = vcmask 7168
    %s19 = scalar_lea.vmem %s1, 2
    %20 = vst.msk [vmem:[%s19] ss:$4 sm:$0xf] %vm18, %v17
    %v21 = vld [vmem:[#allocation0] sm:$0xf]
    %22 = vrot.lane.b32.xlu0 %v21, 125
    %v23 = vpop.permute.xlu0 %22
    %vm24 = vcmask 7168
    %s25 = scalar_lea.vmem %s1, 3
    %26 = vst.msk [vmem:[%s25] ss:$4 sm:$0xf] %vm24, %v23

// kernel: tile.8
$region0: #{tile.8}
  #allocation0 [shape = 's32[1]{0}', space=sflag, size = 0x4, scoped, tag = 'scoped memory for tile.8']
  %s0 = inlined_call_operand.vmem [shape: f32[4], index: 0, kind: input, shape index: {}]
  %s1 = inlined_call_operand.vmem [shape: f32[4,4], index: 1, kind: output, shape index: {}]
  // Predicated region
  $region2: #{tile.8} parent=0 // pred_check
    _
  $region3: #{tile.8} parent=0 // pred_check_branch
    %3 = sbr.rel (0) target = $region5
  $region4: #{tile.8} parent=0 // pred_region
    _
  $region5: #{tile.8} parent=0 // pred_fallthru
    _
  %v4 = vld [vmem:[%s0] ss:$0 sm:$0xff]
  %5 = vst [vmem:[%s1] sm:$0xf] %v4

// kernel: upsample_convT2x2.1
$region0: #{upsample_convT2x2.1}
  #allocation0 [shape = 'u32[]', space=smem, size = 0x4, offset = 0x4, fixed_abs, tag = 'smem constant byte address 0x4 - core index']
  #allocation1 [shape = 'u32[72,128]{1,0:T(1,128)}', space=vmem, size = 0x9000, scoped, tag = 'internal scratch']
  %s0 = inlined_call_operand.vmem [shape: f32[2,4,256], index: 0, kind: input, shape index: {}]
  %s1 = inlined_call_operand.vmem [shape: f32[16,4], index: 1, kind: input, shape index: {}]
  %s2 = inlined_call_operand.vmem [shape: f32[16,1], index: 2, kind: input, shape index: {}]
  %s3 = inlined_call_operand.vmem [shape: f32[2,16,256], index: 3, kind: output, shape index: {}]
  %s4 = sld [smem:[#allocation0]]
  $region79: #{upsample_convT2x2.1} parent=0
    _
  %s6 = ssub.s32 1, %s4
  %s7 = scalar_select 0, %s6, %s4
  $region1: #{upsample_convT2x2.1} parent=0
    #allocation2 [shape = 'u8[16384]{0}', space=vmem, size = 0x4000, scoped, tag = 'output window, operand 0']
    loop: start=0, step=1, limit=6
    $region2: #{upsample_convT2x2.1} parent=1 // loop_pre_header
      _
    $region3: #{upsample_convT2x2.1} parent=1 // loop_header
      %s9 = sphi 0, %s13
      %p10 = scmp.ge.s32.totalorder %s9, 6
      %s16 = sphi 0, %s28
      %s17 = sphi 0, %s24
      %s18 = sphi 0, %s16
      %s19 = sphi 0, %s17
      %s20 = sphi 0, %s18
      %s21 = sphi 0, %s19
      %s33 = sphi 0, %s35
      %s36 = sphi 0, %s33
      %s37 = sphi 0, %s36
      %s53 = sphi 0, %s37
      %s57 = sphi 0, %s57
      %s59 = sphi 0, %s57
      %s60 = sphi 0, %s59
      %s74 = sphi 0, %s60
      %s78 = sphi 0, %s78
      %s80 = sphi 0, %s78
      %s81 = sphi 0, %s80
      %s95 = sphi 0, %s81
      %s103 = sphi 0, %s105
      %s106 = sphi 0, %s103
      %s107 = sphi 0, %s106
      %s123 = sphi 0, %s107
    $region4: #{upsample_convT2x2.1} parent=1 // loop_header_branch
      %12 = sbr.rel (%p10) target = $region8
    $region5: #{upsample_convT2x2.1} parent=1 // loop_body
      %s14 = ssub.s32 %s9, 1
      %s15 = ssub.s32 %s9, 2
      %s22 = sadd.s32 1, %s17
      %p23 = scmp.ge.s32.totalorder %s22, 2
      %s24 = scalar_select %p23, 0, %s22
      %s25 = sadd.s32 1, %s16
      %s26 = scalar_select %p23, %s25, %s16
      %p27 = scmp.ge.s32.totalorder %s26, 2
      %s28 = scalar_select %p27, 0, %s26
      %s29 = ssub.s32 %s16, %s28
      %s30 = ssub.s32 %s17, %s24
      %s31 = sor.u32 %s29, %s30
      %p32 = scmp.eq.s32.totalorder %s31, 0
      %s34 = sadd.s32 %s33, 1
      %s35 = scalar_select %p32, %s33, %s34
      %p38 = pneg %p32
      %p39 = scmp.eq.s32.totalorder %s9, 3
      %p40 = por %p38, %p39
      %p41 = scmp.ne.s32.totalorder %s33, %s36
      %p42 = scmp.eq.s32.totalorder %s9, 0
      %p43 = por %p41, %p42
      %p44 = scmp.ne.s32.totalorder %s33, %s36
      %p45 = scmp.eq.s32.totalorder %s14, 3
      %p46 = por %p44, %p45
      %p47 = scmp.ne.s32.totalorder %s36, %s37
      %p48 = scmp.eq.s32.totalorder %s14, 0
      %p49 = por %p47, %p48
      %p50 = scmp.ne.s32.totalorder %s36, %s37
      %p51 = scmp.eq.s32.totalorder %s15, 3
      %p52 = por %p50, %p51
      %p54 = scmp.ne.s32.totalorder %s37, %s53
      %p55 = scmp.eq.s32.totalorder %s15, 0
      %p56 = por %p54, %p55
      %s58 = sadd.s32 %s57, 1
      %p61 = scmp.eq.s32.totalorder %s9, 3
      %p62 = scmp.ne.s32.totalorder %s57, %s59
      %p63 = scmp.eq.s32.totalorder %s9, 0
      %p64 = por %p62, %p63
      %p65 = scmp.ne.s32.totalorder %s57, %s59
      %p66 = scmp.eq.s32.totalorder %s14, 3
      %p67 = por %p65, %p66
      %p68 = scmp.ne.s32.totalorder %s59, %s60
      %p69 = scmp.eq.s32.totalorder %s14, 0
      %p70 = por %p68, %p69
      %p71 = scmp.ne.s32.totalorder %s59, %s60
      %p72 = scmp.eq.s32.totalorder %s15, 3
      %p73 = por %p71, %p72
      %p75 = scmp.ne.s32.totalorder %s60, %s74
      %p76 = scmp.eq.s32.totalorder %s15, 0
      %p77 = por %p75, %p76
      %s79 = sadd.s32 %s78, 1
      %p82 = scmp.eq.s32.totalorder %s9, 3
      %p83 = scmp.ne.s32.totalorder %s78, %s80
      %p84 = scmp.eq.s32.totalorder %s9, 0
      %p85 = por %p83, %p84
      %p86 = scmp.ne.s32.totalorder %s78, %s80
      %p87 = scmp.eq.s32.totalorder %s14, 3
      %p88 = por %p86, %p87
      %p89 = scmp.ne.s32.totalorder %s80, %s81
      %p90 = scmp.eq.s32.totalorder %s14, 0
      %p91 = por %p89, %p90
      %p92 = scmp.ne.s32.totalorder %s80, %s81
      %p93 = scmp.eq.s32.totalorder %s15, 3
      %p94 = por %p92, %p93
      %p96 = scmp.ne.s32.totalorder %s81, %s95
      %p97 = scmp.eq.s32.totalorder %s15, 0
      %p98 = por %p96, %p97
      %s99 = ssub.s32 %s16, %s28
      %s100 = ssub.s32 %s17, %s24
      %s101 = sor.u32 %s99, %s100
      %p102 = scmp.eq.s32.totalorder %s101, 0
      %s104 = sadd.s32 %s103, 1
      %s105 = scalar_select %p102, %s103, %s104
      %p108 = pneg %p102
      %p109 = scmp.eq.s32.totalorder %s9, 3
      %p110 = por %p108, %p109
      %p111 = scmp.ne.s32.totalorder %s103, %s106
      %p112 = scmp.eq.s32.totalorder %s9, 0
      %p113 = por %p111, %p112
      %p114 = scmp.ne.s32.totalorder %s103, %s106
      %p115 = scmp.eq.s32.totalorder %s14, 3
      %p116 = por %p114, %p115
      %p117 = scmp.ne.s32.totalorder %s106, %s107
      %p118 = scmp.eq.s32.totalorder %s14, 0
      %p119 = por %p117, %p118
      %p120 = scmp.ne.s32.totalorder %s106, %s107
      %p121 = scmp.eq.s32.totalorder %s15, 3
      %p122 = por %p120, %p121
      %p124 = scmp.ne.s32.totalorder %s107, %s123
      %p125 = scmp.eq.s32.totalorder %s15, 0
      %p126 = por %p124, %p125
      %p127 = scmp.le.s32.totalorder 1, %s9
      %p128 = scmp.lt.s32.totalorder %s9, 5
      %p129 = pnand %p127, %p128
      %p130 = pneg %p129
      // Predicated region
      $region9: #{upsample_convT2x2.1} parent=5 // pred_check
        _
      $region10: #{upsample_convT2x2.1} parent=5 // pred_check_branch
        %132 = sbr.rel (%p129) target = $region12
      $region11: #{upsample_convT2x2.1} parent=5 // pred_region
        %s133 = ssub.s32 %s9, 1
        // Predicated region
        $region13: #{upsample_convT2x2.1} parent=11 // pred_check
          %p134 = pneg %p70
        $region14: #{upsample_convT2x2.1} parent=11 // pred_check_branch
          %136 = sbr.rel (%p134) target = $region16
        $region15: #{upsample_convT2x2.1} parent=11 // pred_region
          _
        $region16: #{upsample_convT2x2.1} parent=11 // pred_fallthru
          _
        // Predicated region
        $region17: #{upsample_convT2x2.1} parent=11 // pred_check
          %p137 = pneg %p91
        $region18: #{upsample_convT2x2.1} parent=11 // pred_check_branch
          %139 = sbr.rel (%p137) target = $region20
        $region19: #{upsample_convT2x2.1} parent=11 // pred_region
          _
        $region20: #{upsample_convT2x2.1} parent=11 // pred_fallthru
          _
      $region12: #{upsample_convT2x2.1} parent=5 // pred_fallthru
        _
      %p140 = scmp.lt.s32.totalorder %s9, 4
      // Predicated region
      $region21: #{upsample_convT2x2.1} parent=5 // pred_check
        %p141 = pneg %p140
      $region22: #{upsample_convT2x2.1} parent=5 // pred_check_branch
        %143 = sbr.rel (%p141) target = $region24
      $region23: #{upsample_convT2x2.1} parent=5 // pred_region
        // Predicated region
        $region25: #{upsample_convT2x2.1} parent=23 // pred_check
          %p144 = pneg %p43
        $region26: #{upsample_convT2x2.1} parent=23 // pred_check_branch
          %146 = sbr.rel (%p144) target = $region28
        $region27: #{upsample_convT2x2.1} parent=23 // pred_region
          %p147 = scmp.lt.s32.totalorder %s16, 1
          %s148 = scalar_select %p147, %s16, 1
          %p149 = scmp.lt.s32.totalorder %s17, 1
          %s150 = scalar_select %p149, %s17, 1
          %s151 = smul.addr %s148, 2
          %s152 = sadd.s32 %s150, %s151
          %s153 = smul.addr %s152, 4
          %s154 = scalar_lea.vmem %s0, %s153
        $region28: #{upsample_convT2x2.1} parent=23 // pred_fallthru
          _
      $region24: #{upsample_convT2x2.1} parent=5 // pred_fallthru
        _
      %p155 = scmp.le.s32.totalorder 1, %s9
      %p156 = scmp.lt.s32.totalorder %s9, 5
      %p157 = pnand %p155, %p156
      %p158 = pneg %p157
      // Predicated region
      $region29: #{upsample_convT2x2.1} parent=5 // pred_check
        _
      $region30: #{upsample_convT2x2.1} parent=5 // pred_check_branch
        %160 = sbr.rel (%p157) target = $region32
      $region31: #{upsample_convT2x2.1} parent=5 // pred_region
        %s161 = ssub.s32 %s9, 1
        %p162 = scmp.lt.s32.totalorder %s18, 1
        %s163 = scalar_select %p162, %s18, 1
        %p164 = scmp.lt.s32.totalorder %s19, 1
        %s165 = scalar_select %p164, %s19, 1
        %s166 = smul.addr %s163, 2
        %s167 = sadd.s32 %s165, %s166
        %s168 = smul.addr %s167, 4
        %s169 = scalar_lea.vmem %s0, %s168
        %p170 = pneg %p49
        %p171 = pneg %p46
        %p172 = pneg %p70
        %p173 = pneg %p67
        %p174 = pneg %p91
        %p175 = pneg %p88
        %p176 = pneg %p119
        %p177 = pneg %p116
        %s178 = sand.u32 %s106, 1
        %s179 = sand.u32 %s106, 1
        %s180 = smul.addr %s179, 16
        %s181 = scalar_lea.vmem [#allocation2], %s180
        %p182 = scmp.lt.s32.totalorder %s18, 1
        %s183 = scalar_select %p182, %s18, 1
        %p184 = scmp.lt.s32.totalorder %s19, 1
        %s185 = scalar_select %p184, %s19, 1
        %s186 = smul.addr %s183, 2
        %s187 = sadd.s32 %s185, %s186
        %s188 = smul.addr %s187, 4
        %s189 = scalar_lea.vmem %s0, %s188
        %v190 = vld [vmem:[%s1] sm:$0xff]
        %v191 = vld [vmem:[%s1 + $0x8] sm:$0xff]
        %v192 = vld [vmem:[%s189] sm:$0xf]
        %v193 = vld [vmem:[%s2] sm:$0xff]
        %v194 = vld [vmem:[%s2 + $0x8] sm:$0xff]
        %196 = vset.pattern.permute.xlu0 0
        %197 = vperm.xlu0 %196, %v193
        %v198 = vpop.permute.xlu0 %197
        %201 = vset.pattern.permute.xlu0 0
        %202 = vperm.xlu0 %201, %v194
        %v203 = vpop.permute.xlu0 %202
        %vm205 = vcmask 31744
        %v207 = vsel %vm205, %v190, 0
        %v210 = vsel %vm205, %v191, 0
        %vm212 = vcmask 1043456
        %v214 = vsel %vm212, %v192, 0
        %216 = vmatpush.msra.mxu0 0.0
        %217 = vmatpush.msra.mxu0 0.0
        %218 = vmatpush.msra.mxu0 0.0
        %219 = vmatpush.msra.mxu0 0.0
        %220 = vmatpush.msra.mxu0 0.0
        %221 = vmatpush.msra.mxu0 0.0
        %222 = vmatpush.msra.mxu0 0.0
        %223 = vmatpush.msra.mxu0 0.0
        %224 = vmatpush.msra.mxu0 0.0
        %225 = vmatpush.msra.mxu0 0.0
        %226 = vmatpush.msra.mxu0 0.0
        %227 = vmatpush.msra.mxu0 0.0
        %228 = vmatpush.msra.mxu0 0.0
        %229 = vmatpush.msra.mxu0 0.0
        %230 = vmatpush.msra.mxu0 0.0
        %231 = vmatpush.msra.mxu0 %v214
        %232 = vmatmul.f32.gmra.mxu0 %v207
        %v233 = vpop.f32.mrf.mxu0
        %v234 = vadd.f32 %v198, %v233
        %235 = vmatmul.f32.gmra.mxu0 %v210
        %v236 = vpop.f32.mrf.mxu0
        %v237 = vadd.f32 %v203, %v236
        %238 = vdwg.mxu0
        %239 = vst [vmem:[%s181] sm:$0xff] %v234
        %240 = vst [vmem:[%s181 + $0x8] sm:$0xff] %v237
        %s241 = sand.u32 %s106, 1
        %s242 = sand.u32 %s106, 1
        %s243 = smul.addr %s242, 16
        %s244 = scalar_lea.vmem [#allocation2], %s243
        // Predicated region
        $region33: #{upsample_convT2x2.1} parent=31 // pred_check
          %p245 = pneg %p116
        $region34: #{upsample_convT2x2.1} parent=31 // pred_check_branch
          %247 = sbr.rel (%p245) target = $region36
        $region35: #{upsample_convT2x2.1} parent=31 // pred_region
          %s248 = smul.addr %s18, 4
          %s249 = sadd.s32 %s19, %s248
          %s250 = smul.addr %s249, 8
          %s251 = scalar_lea.vmem %s3, %s250
          // Predicated region
          $region37: #{upsample_convT2x2.1} parent=35 // pred_check
            _
          $region38: #{upsample_convT2x2.1} parent=35 // pred_check_branch
            %253 = sbr.rel (0) target = $region40
          $region39: #{upsample_convT2x2.1} parent=35 // pred_region
            // Predicated region
            $region41: #{upsample_convT2x2.1} parent=39 // pred_check
              _
            $region42: #{upsample_convT2x2.1} parent=39 // pred_check_branch
              %255 = sbr.rel (0) target = $region44
            $region43: #{upsample_convT2x2.1} parent=39 // pred_region
              // Predicated region
              $region56: #{upsample_convT2x2.1} parent=43 // pred_check
                _
              $region57: #{upsample_convT2x2.1} parent=43 // pred_check_branch
                %273 = sbr.rel (0) target = $region59
              $region58: #{upsample_convT2x2.1} parent=43 // pred_region
                loop: start=0, step=1, limit=1
                $region60: #{upsample_convT2x2.1} parent=58 // loop_pre_header
                  _
                $region61: #{upsample_convT2x2.1} parent=58 // loop_header
                  %s275 = sphi 0, %s279
                  %p276 = scmp.ge.s32.totalorder %s275, 1
                  %s280 = sphi %s244, %s244
                  %s281 = sphi %s251, %s251
                $region62: #{upsample_convT2x2.1} parent=58 // loop_header_branch
                  %278 = sbr.rel (%p276) target = $region66
                $region63: #{upsample_convT2x2.1} parent=58 // loop_body
                  %v282 = vld [vmem:[%s280] sm:$0xff]
                  %283 = vst [vmem:[%s281] sm:$0xff] %v282
                  %v284 = vld [vmem:[%s280 + $0x8] sm:$0xff]
                  %285 = vst [vmem:[%s281 + $0x10] sm:$0xff] %v284
                $region64: #{upsample_convT2x2.1} parent=58 // loop_footer
                  %s279 = sadd.s32 1, %s275
                $region65: #{upsample_convT2x2.1} parent=58 // loop_footer_branch
                  %274 = sbr.rel target = $region61
                $region66: #{upsample_convT2x2.1} parent=58 // loop_exit
                  _
              $region59: #{upsample_convT2x2.1} parent=43 // pred_fallthru
                _
              // Predicated region
              $region67: #{upsample_convT2x2.1} parent=43 // pred_check
                _
              $region68: #{upsample_convT2x2.1} parent=43 // pred_check_branch
                %287 = sbr.rel target = $region70
              $region69: #{upsample_convT2x2.1} parent=43 // pred_region
                _
              $region70: #{upsample_convT2x2.1} parent=43 // pred_fallthru
                _
            $region44: #{upsample_convT2x2.1} parent=39 // pred_fallthru
              _
            // Predicated region
            $region45: #{upsample_convT2x2.1} parent=39 // pred_check
              _
            $region46: #{upsample_convT2x2.1} parent=39 // pred_check_branch
              %257 = sbr.rel target = $region48
            $region47: #{upsample_convT2x2.1} parent=39 // pred_region
              %s259 = ssub.s32 256, 1
              loop: start=0, step=1, limit=1
              $region49: #{upsample_convT2x2.1} parent=47 // loop_pre_header
                _
              $region50: #{upsample_convT2x2.1} parent=47 // loop_header
                %s261 = sphi 0, %s265
                %p262 = scmp.ge.s32.totalorder %s261, 1
                %s266 = sphi %s244, %s244
                %s267 = sphi %s251, %s251
              $region51: #{upsample_convT2x2.1} parent=47 // loop_header_branch
                %264 = sbr.rel (%p262) target = $region55
              $region52: #{upsample_convT2x2.1} parent=47 // loop_body
                %v268 = vld [vmem:[%s266] sm:%s259]
                %269 = vst [vmem:[%s267] sm:%s259] %v268
                %v270 = vld [vmem:[%s266 + $0x8] sm:%s259]
                %271 = vst [vmem:[%s267 + $0x10] sm:%s259] %v270
              $region53: #{upsample_convT2x2.1} parent=47 // loop_footer
                %s265 = sadd.s32 1, %s261
              $region54: #{upsample_convT2x2.1} parent=47 // loop_footer_branch
                %260 = sbr.rel target = $region50
              $region55: #{upsample_convT2x2.1} parent=47 // loop_exit
                _
            $region48: #{upsample_convT2x2.1} parent=39 // pred_fallthru
              _
          $region40: #{upsample_convT2x2.1} parent=35 // pred_fallthru
            _
          %288 = vnop
        $region36: #{upsample_convT2x2.1} parent=31 // pred_fallthru
          _
      $region32: #{upsample_convT2x2.1} parent=5 // pred_fallthru
        _
      %p289 = scmp.le.s32.totalorder 2, %s9
      // Predicated region
      $region71: #{upsample_convT2x2.1} parent=5 // pred_check
        %p290 = pneg %p289
      $region72: #{upsample_convT2x2.1} parent=5 // pred_check_branch
        %292 = sbr.rel (%p290) target = $region74
      $region73: #{upsample_convT2x2.1} parent=5 // pred_region
        %s293 = ssub.s32 %s9, 2
        // Predicated region
        $region75: #{upsample_convT2x2.1} parent=73 // pred_check
          %p294 = pneg %p122
        $region76: #{upsample_convT2x2.1} parent=73 // pred_check_branch
          %296 = sbr.rel (%p294) target = $region78
        $region77: #{upsample_convT2x2.1} parent=73 // pred_region
          %s297 = sand.u32 %s107, 1
          %s298 = sand.u32 %s107, 1
          %s299 = smul.addr %s298, 16
          %s300 = scalar_lea.vmem [#allocation2], %s299
        $region78: #{upsample_convT2x2.1} parent=73 // pred_fallthru
          _
      $region74: #{upsample_convT2x2.1} parent=5 // pred_fallthru
        _
    $region6: #{upsample_convT2x2.1} parent=1 // loop_footer
      %s13 = sadd.s32 1, %s9
    $region7: #{upsample_convT2x2.1} parent=1 // loop_footer_branch
      %8 = sbr.rel target = $region3
    $region8: #{upsample_convT2x2.1} parent=1 // loop_exit
      _

</llo_original>
